<compile_context>
chip_gen: v7x
topology: tpu7x:2x2x1
jax: 0.10.0
libtpu: 0.0.40
codegen_flags: <defaults>
</compile_context>

<pallas_src>
import functools

import jax
import jax.numpy as jnp
from jax import lax
from jax.experimental import pallas as pl
from jax.experimental.pallas import tpu as pltpu


# ----------------------------- Pallas kernel -------------------------------

def _upconv_kernel(shuf_ref, w_ref, b_ref, o_ref, *, th, wo, c, kh, kw):
    """Fused im2col + conv matmul + bias for one (batch, row-tile) grid step.

    shuf_ref: (Hs, Ws, C)      bf16  per-batch up-sampled image (VMEM-resident)
    w_ref:    (KH*KW, C, Cout) bf16  VMEM-resident (constant index map)
    b_ref:    (1, Cout)        f32   VMEM-resident
    o_ref:    (th, Wo, Cout)   f32   lane-dense output row slab
    """
    row0 = pl.program_id(1) * th
    bias_row = b_ref[...]                                # (1, Cout) f32, hoisted
    taps = [w_ref[t] for t in range(kh * kw)]            # each (C, Cout) bf16

    def body(yy, carry):
        y = row0 + yy
        # Bias initialises the accumulator; (1, Cout) broadcasts against
        # (Wo, Cout) on the first accumulate.  Accumulation stays f32.
        acc = bias_row
        for tap in range(kh * kw):
            dh, dw = tap // kw, tap % kw
            win = shuf_ref[y + dh, pl.ds(dw, wo), :]      # (Wo, C) bf16
            acc = acc + jnp.dot(win, taps[tap],
                                preferred_element_type=jnp.float32)
        o_ref[yy] = acc.astype(o_ref.dtype)
        return carry

    lax.fori_loop(0, th, body, 0)


# ----------------------------- tiling helper -------------------------------

def _pick_row_tile(ho, wo, n_batch, target_rows=2048):
    """Output rows per grid step: largest divisor of `ho` whose matmul row
    count (th * wo) stays under `target_rows` (big tiles amortise the
    ~0.35us/grid-step overhead), while keeping >= 2 total grid steps so v7x's
    second TensorCore has work."""
    divisors = [d for d in range(1, ho + 1) if ho % d == 0]
    under = [d for d in divisors if d * wo <= target_rows]
    th = max(under) if under else 1
    if n_batch * (ho // th) < 2:
        smaller = [d for d in under if d < ho]
        if smaller:
            th = max(smaller)
    return th


# ----------------------------- module wrapper ------------------------------

def upsample_conv2d_forward(x_nchw, weight_oihw, bias, upscale_factor=2,
                            target_rows_per_tile=2048):
    r = int(upscale_factor)
    n, c, h, w = x_nchw.shape
    cout, cin, kh, kw = weight_oihw.shape
    assert cin == c, (cin, c)
    hs, ws = h * r, w * r
    ho, wo = hs - kh + 1, ws - kw + 1

    # ---- repeat + pixel-shuffle folded into a single gather, emitted directly
    #      as NHWC bf16 (cast first: only bf16 copies of the up-sampled image
    #      ever hit HBM):
    #        shuffled[n, Y, X, ch] = x[n, (ch*r^2 + (Y%r)*r + X%r) % C, Y//r, X//r]
    x_bf = x_nchw.astype(jnp.bfloat16)
    co = jnp.arange(c)[:, None, None]
    pi = jnp.arange(r)[None, :, None]
    pj = jnp.arange(r)[None, None, :]
    idx = (co * r * r + pi * r + pj) % c                      # (C, r, r)
    g = jnp.take(x_bf, idx, axis=1)                           # (N, C, r, r, H, W)
    shuf_nhwc = g.transpose(0, 4, 2, 5, 3, 1).reshape(n, hs, ws, c)

    # ---- conv weights OIHW -> (KH*KW, Cin, Cout) bf16 (tap-major), bias f32.
    w_taps = (weight_oihw.transpose(2, 3, 1, 0)
              .reshape(kh * kw, c, cout).astype(jnp.bfloat16))
    b2 = bias.reshape(1, cout).astype(jnp.float32)

    th = _pick_row_tile(ho, wo, n, target_rows_per_tile)
    n_row_tiles = ho // th

    kernel = functools.partial(_upconv_kernel, th=th, wo=wo, c=c, kh=kh, kw=kw)

    # VMEM working set (double-buffered): 2*Hs*Ws*C*2B input + 2*th*Wo*Cout*4B
    # output + ~KB of weights/bias -- comfortably under every generation's
    # scoped limit at these sizes; the explicit 32 MiB cap keeps headroom on
    # v7x (64 MiB physical) while matching the v6e/v7x default.
    out_nhwc = pl.pallas_call(
        kernel,
        out_shape=jax.ShapeDtypeStruct((n, ho, wo, cout), jnp.float32),
        grid_spec=pltpu.PrefetchScalarGridSpec(
            num_scalar_prefetch=0,
            grid=(n, n_row_tiles),
            in_specs=[
                # Full per-batch up-sampled image; index constant across the
                # row-tile axis -> fetched from HBM once per batch element.
                pl.BlockSpec((None, hs, ws, c), lambda i, t: (i, 0, 0, 0)),
                pl.BlockSpec((kh * kw, c, cout), lambda i, t: (0, 0, 0)),
                pl.BlockSpec((1, cout), lambda i, t: (0, 0)),
            ],
            out_specs=pl.BlockSpec((None, th, wo, cout),
                                   lambda i, t: (i, t, 0, 0)),
        ),
        compiler_params=pltpu.CompilerParams(
            dimension_semantics=("parallel", "parallel"),
            vmem_limit_bytes=32 * 1024 * 1024,
        ),
        cost_estimate=pl.CostEstimate(
            flops=2 * n * ho * wo * kh * kw * c * cout,
            transcendentals=0,
            bytes_accessed=(n * hs * ws * c * 2 + kh * kw * c * cout * 2
                            + cout * 4 + n * ho * wo * cout * 4),
        ),
    )(shuf_nhwc, w_taps, b2)

    # NCHW is the nn.Module contract; consumers that can take NHWC should use
    # `out_nhwc` directly and skip this transpose (it re-reads/re-writes the
    # whole output).
    return jnp.transpose(out_nhwc, (0, 3, 1, 2))


# ----------------------------- demo / self-check ---------------------------

if __name__ == "__main__":
    # Module defaults: kernel_size=3, n_filters=128, upscale_factor=2, padding=0.
    N, C, H, W = 2, 4, 16, 16
    KSIZE, NFILT, R = 3, 128, 2

    key = jax.random.PRNGKey(0)
    kx, kwt, kb = jax.random.split(key, 3)
    x = jax.random.normal(kx, (N, C, H, W), dtype=jnp.float32)
    weight = 0.1 * jax.random.normal(kwt, (NFILT, C, KSIZE, KSIZE), dtype=jnp.float32)
    bias = 0.1 * jax.random.normal(kb, (NFILT,), dtype=jnp.float32)

    out = upsample_conv2d_forward(x, weight, bias, upscale_factor=R)
    out = jax.block_until_ready(out)
    assert out.shape == (N, NFILT, H * R - KSIZE + 1, W * R - KSIZE + 1), out.shape

    # Reference: exact PyTorch op order (repeat -> PixelShuffle -> conv) with
    # the same bf16 operand precision as the kernel (f32 accumulation).
    stacked = jnp.tile(x, (1, R * R, 1, 1))
    nn_, cc_, hh_, ww_ = stacked.shape
    cs = cc_ // (R * R)
    shuffled = (stacked.reshape(nn_, cs, R, R, hh_, ww_)
                .transpose(0, 1, 4, 2, 5, 3)
                .reshape(nn_, cs, hh_ * R, ww_ * R))
    ref = jax.lax.conv_general_dilated(
        shuffled.astype(jnp.bfloat16), weight.astype(jnp.bfloat16),
        window_strides=(1, 1), padding="VALID",
        dimension_numbers=("NCHW", "OIHW", "NCHW"),
        preferred_element_type=jnp.float32,
    ) + bias[None, :, None, None]

    err = jnp.max(jnp.abs(out - ref))
    assert err < 2e-3, err

    print("KERNEL_OK")
</pallas_src>

<mosaic_0001>
module attributes {stable_mosaic.version = 11 : i64} {
  func.func @_upconv_kernel(%arg0: i32, %arg1: i32, %arg2: memref<1x32x32x4xbf16, #tpu.memory_space<vmem>>, %arg3: memref<9x4x128xbf16, #tpu.memory_space<vmem>>, %arg4: memref<1x128xf32, #tpu.memory_space<vmem>>, %arg5: memref<1x30x30x128xf32, #tpu.memory_space<vmem>>) attributes {dimension_semantics = [#tpu.dimension_semantics<parallel>, #tpu.dimension_semantics<parallel>], iteration_bounds = array<i64: 2, 1>, scalar_prefetch = 0 : i64, scratch_operands = 0 : i64, tpu.core_type = #tpu.core_type<tc>, window_params = [{transform_indices = @transform_0, window_bounds = array<i64: 1, 32, 32, 4>}, {pipeline_mode = #tpu.pipeline_mode<synchronous>, transform_indices = @transform_1, window_bounds = array<i64: 9, 4, 128>}, {pipeline_mode = #tpu.pipeline_mode<synchronous>, transform_indices = @transform_2, window_bounds = array<i64: 1, 128>}, {transform_indices = @transform_3, window_bounds = array<i64: 1, 30, 30, 128>}]} {
    %c30_i32 = arith.constant 30 : i32
    %0 = arith.muli %arg1, %c30_i32 : i32
    %c0 = arith.constant 0 : index
    %c0_0 = arith.constant 0 : index
    %1 = vector.load %arg4[%c0, %c0_0] : memref<1x128xf32, #tpu.memory_space<vmem>>, vector<1x128xf32>
    %c0_1 = arith.constant 0 : index
    %c0_2 = arith.constant 0 : index
    %c0_3 = arith.constant 0 : index
    %2 = vector.load %arg3[%c0_1, %c0_2, %c0_3] : memref<9x4x128xbf16, #tpu.memory_space<vmem>>, vector<1x4x128xbf16>
    %3 = vector.shape_cast %2 : vector<1x4x128xbf16> to vector<4x128xbf16>
    %c1 = arith.constant 1 : index
    %c0_4 = arith.constant 0 : index
    %c0_5 = arith.constant 0 : index
    %4 = vector.load %arg3[%c1, %c0_4, %c0_5] : memref<9x4x128xbf16, #tpu.memory_space<vmem>>, vector<1x4x128xbf16>
    %5 = vector.shape_cast %4 : vector<1x4x128xbf16> to vector<4x128xbf16>
    %c2 = arith.constant 2 : index
    %c0_6 = arith.constant 0 : index
    %c0_7 = arith.constant 0 : index
    %6 = vector.load %arg3[%c2, %c0_6, %c0_7] : memref<9x4x128xbf16, #tpu.memory_space<vmem>>, vector<1x4x128xbf16>
    %7 = vector.shape_cast %6 : vector<1x4x128xbf16> to vector<4x128xbf16>
    %c3 = arith.constant 3 : index
    %c0_8 = arith.constant 0 : index
    %c0_9 = arith.constant 0 : index
    %8 = vector.load %arg3[%c3, %c0_8, %c0_9] : memref<9x4x128xbf16, #tpu.memory_space<vmem>>, vector<1x4x128xbf16>
    %9 = vector.shape_cast %8 : vector<1x4x128xbf16> to vector<4x128xbf16>
    %c4 = arith.constant 4 : index
    %c0_10 = arith.constant 0 : index
    %c0_11 = arith.constant 0 : index
    %10 = vector.load %arg3[%c4, %c0_10, %c0_11] : memref<9x4x128xbf16, #tpu.memory_space<vmem>>, vector<1x4x128xbf16>
    %11 = vector.shape_cast %10 : vector<1x4x128xbf16> to vector<4x128xbf16>
    %c5 = arith.constant 5 : index
    %c0_12 = arith.constant 0 : index
    %c0_13 = arith.constant 0 : index
    %12 = vector.load %arg3[%c5, %c0_12, %c0_13] : memref<9x4x128xbf16, #tpu.memory_space<vmem>>, vector<1x4x128xbf16>
    %13 = vector.shape_cast %12 : vector<1x4x128xbf16> to vector<4x128xbf16>
    %c6 = arith.constant 6 : index
    %c0_14 = arith.constant 0 : index
    %c0_15 = arith.constant 0 : index
    %14 = vector.load %arg3[%c6, %c0_14, %c0_15] : memref<9x4x128xbf16, #tpu.memory_space<vmem>>, vector<1x4x128xbf16>
    %15 = vector.shape_cast %14 : vector<1x4x128xbf16> to vector<4x128xbf16>
    %c7 = arith.constant 7 : index
    %c0_16 = arith.constant 0 : index
    %c0_17 = arith.constant 0 : index
    %16 = vector.load %arg3[%c7, %c0_16, %c0_17] : memref<9x4x128xbf16, #tpu.memory_space<vmem>>, vector<1x4x128xbf16>
    %17 = vector.shape_cast %16 : vector<1x4x128xbf16> to vector<4x128xbf16>
    %c8 = arith.constant 8 : index
    %c0_18 = arith.constant 0 : index
    %c0_19 = arith.constant 0 : index
    %18 = vector.load %arg3[%c8, %c0_18, %c0_19] : memref<9x4x128xbf16, #tpu.memory_space<vmem>>, vector<1x4x128xbf16>
    %19 = vector.shape_cast %18 : vector<1x4x128xbf16> to vector<4x128xbf16>
    %c0_i32 = arith.constant 0 : i32
    %c30_i32_20 = arith.constant 30 : i32
    %20 = arith.addi %c0_i32, %c30_i32_20 : i32
    %c1_i32 = arith.constant 1 : i32
    scf.for %arg6 = %c0_i32 to %20 step %c1_i32  : i32 {
      %21 = arith.addi %0, %arg6 : i32
      %c0_i32_22 = arith.constant 0 : i32
      %22 = arith.addi %21, %c0_i32_22 : i32
      %c0_23 = arith.constant 0 : index
      %23 = arith.index_cast %22 : i32 to index
      %c0_24 = arith.constant 0 : index
      %c0_25 = arith.constant 0 : index
      %24 = vector.load %arg2[%c0_23, %23, %c0_24, %c0_25] : memref<1x32x32x4xbf16, #tpu.memory_space<vmem>>, vector<1x1x30x4xbf16>
      %25 = vector.shape_cast %24 : vector<1x1x30x4xbf16> to vector<30x4xbf16>
      %cst = arith.constant dense<0.000000e+00> : vector<30x128xf32>
      %26 = tpu.matmul %25, %3, %cst {dimension_numbers = #tpu.dot_dimension_numbers<[1], [0], [0], [1], [0, 0, 1, 1], [], []>} : vector<30x4xbf16>, vector<4x128xbf16>, vector<30x128xf32> -> vector<30x128xf32>
      %27 = vector.broadcast %1 : vector<1x128xf32> to vector<30x128xf32>
      %28 = arith.addf %27, %26 : vector<30x128xf32>
      %c0_i32_26 = arith.constant 0 : i32
      %29 = arith.addi %21, %c0_i32_26 : i32
      %c0_27 = arith.constant 0 : index
      %30 = arith.index_cast %29 : i32 to index
      %c1_28 = arith.constant 1 : index
      %c0_29 = arith.constant 0 : index
      %31 = vector.load %arg2[%c0_27, %30, %c1_28, %c0_29] : memref<1x32x32x4xbf16, #tpu.memory_space<vmem>>, vector<1x1x30x4xbf16>
      %32 = vector.shape_cast %31 : vector<1x1x30x4xbf16> to vector<30x4xbf16>
      %cst_30 = arith.constant dense<0.000000e+00> : vector<30x128xf32>
      %33 = tpu.matmul %32, %5, %cst_30 {dimension_numbers = #tpu.dot_dimension_numbers<[1], [0], [0], [1], [0, 0, 1, 1], [], []>} : vector<30x4xbf16>, vector<4x128xbf16>, vector<30x128xf32> -> vector<30x128xf32>
      %34 = arith.addf %28, %33 : vector<30x128xf32>
      %c0_i32_31 = arith.constant 0 : i32
      %35 = arith.addi %21, %c0_i32_31 : i32
      %c0_32 = arith.constant 0 : index
      %36 = arith.index_cast %35 : i32 to index
      %c2_33 = arith.constant 2 : index
      %c0_34 = arith.constant 0 : index
      %37 = vector.load %arg2[%c0_32, %36, %c2_33, %c0_34] : memref<1x32x32x4xbf16, #tpu.memory_space<vmem>>, vector<1x1x30x4xbf16>
      %38 = vector.shape_cast %37 : vector<1x1x30x4xbf16> to vector<30x4xbf16>
      %cst_35 = arith.constant dense<0.000000e+00> : vector<30x128xf32>
      %39 = tpu.matmul %38, %7, %cst_35 {dimension_numbers = #tpu.dot_dimension_numbers<[1], [0], [0], [1], [0, 0, 1, 1], [], []>} : vector<30x4xbf16>, vector<4x128xbf16>, vector<30x128xf32> -> vector<30x128xf32>
      %40 = arith.addf %34, %39 : vector<30x128xf32>
      %c1_i32_36 = arith.constant 1 : i32
      %41 = arith.addi %21, %c1_i32_36 : i32
      %c0_37 = arith.constant 0 : index
      %42 = arith.index_cast %41 : i32 to index
      %c0_38 = arith.constant 0 : index
      %c0_39 = arith.constant 0 : index
      %43 = vector.load %arg2[%c0_37, %42, %c0_38, %c0_39] : memref<1x32x32x4xbf16, #tpu.memory_space<vmem>>, vector<1x1x30x4xbf16>
      %44 = vector.shape_cast %43 : vector<1x1x30x4xbf16> to vector<30x4xbf16>
      %cst_40 = arith.constant dense<0.000000e+00> : vector<30x128xf32>
      %45 = tpu.matmul %44, %9, %cst_40 {dimension_numbers = #tpu.dot_dimension_numbers<[1], [0], [0], [1], [0, 0, 1, 1], [], []>} : vector<30x4xbf16>, vector<4x128xbf16>, vector<30x128xf32> -> vector<30x128xf32>
      %46 = arith.addf %40, %45 : vector<30x128xf32>
      %c1_i32_41 = arith.constant 1 : i32
      %47 = arith.addi %21, %c1_i32_41 : i32
      %c0_42 = arith.constant 0 : index
      %48 = arith.index_cast %47 : i32 to index
      %c1_43 = arith.constant 1 : index
      %c0_44 = arith.constant 0 : index
      %49 = vector.load %arg2[%c0_42, %48, %c1_43, %c0_44] : memref<1x32x32x4xbf16, #tpu.memory_space<vmem>>, vector<1x1x30x4xbf16>
      %50 = vector.shape_cast %49 : vector<1x1x30x4xbf16> to vector<30x4xbf16>
      %cst_45 = arith.constant dense<0.000000e+00> : vector<30x128xf32>
      %51 = tpu.matmul %50, %11, %cst_45 {dimension_numbers = #tpu.dot_dimension_numbers<[1], [0], [0], [1], [0, 0, 1, 1], [], []>} : vector<30x4xbf16>, vector<4x128xbf16>, vector<30x128xf32> -> vector<30x128xf32>
      %52 = arith.addf %46, %51 : vector<30x128xf32>
      %c1_i32_46 = arith.constant 1 : i32
      %53 = arith.addi %21, %c1_i32_46 : i32
      %c0_47 = arith.constant 0 : index
      %54 = arith.index_cast %53 : i32 to index
      %c2_48 = arith.constant 2 : index
      %c0_49 = arith.constant 0 : index
      %55 = vector.load %arg2[%c0_47, %54, %c2_48, %c0_49] : memref<1x32x32x4xbf16, #tpu.memory_space<vmem>>, vector<1x1x30x4xbf16>
      %56 = vector.shape_cast %55 : vector<1x1x30x4xbf16> to vector<30x4xbf16>
      %cst_50 = arith.constant dense<0.000000e+00> : vector<30x128xf32>
      %57 = tpu.matmul %56, %13, %cst_50 {dimension_numbers = #tpu.dot_dimension_numbers<[1], [0], [0], [1], [0, 0, 1, 1], [], []>} : vector<30x4xbf16>, vector<4x128xbf16>, vector<30x128xf32> -> vector<30x128xf32>
      %58 = arith.addf %52, %57 : vector<30x128xf32>
      %c2_i32 = arith.constant 2 : i32
      %59 = arith.addi %21, %c2_i32 : i32
      %c0_51 = arith.constant 0 : index
      %60 = arith.index_cast %59 : i32 to index
      %c0_52 = arith.constant 0 : index
      %c0_53 = arith.constant 0 : index
      %61 = vector.load %arg2[%c0_51, %60, %c0_52, %c0_53] : memref<1x32x32x4xbf16, #tpu.memory_space<vmem>>, vector<1x1x30x4xbf16>
      %62 = vector.shape_cast %61 : vector<1x1x30x4xbf16> to vector<30x4xbf16>
      %cst_54 = arith.constant dense<0.000000e+00> : vector<30x128xf32>
      %63 = tpu.matmul %62, %15, %cst_54 {dimension_numbers = #tpu.dot_dimension_numbers<[1], [0], [0], [1], [0, 0, 1, 1], [], []>} : vector<30x4xbf16>, vector<4x128xbf16>, vector<30x128xf32> -> vector<30x128xf32>
      %64 = arith.addf %58, %63 : vector<30x128xf32>
      %c2_i32_55 = arith.constant 2 : i32
      %65 = arith.addi %21, %c2_i32_55 : i32
      %c0_56 = arith.constant 0 : index
      %66 = arith.index_cast %65 : i32 to index
      %c1_57 = arith.constant 1 : index
      %c0_58 = arith.constant 0 : index
      %67 = vector.load %arg2[%c0_56, %66, %c1_57, %c0_58] : memref<1x32x32x4xbf16, #tpu.memory_space<vmem>>, vector<1x1x30x4xbf16>
      %68 = vector.shape_cast %67 : vector<1x1x30x4xbf16> to vector<30x4xbf16>
      %cst_59 = arith.constant dense<0.000000e+00> : vector<30x128xf32>
      %69 = tpu.matmul %68, %17, %cst_59 {dimension_numbers = #tpu.dot_dimension_numbers<[1], [0], [0], [1], [0, 0, 1, 1], [], []>} : vector<30x4xbf16>, vector<4x128xbf16>, vector<30x128xf32> -> vector<30x128xf32>
      %70 = arith.addf %64, %69 : vector<30x128xf32>
      %c2_i32_60 = arith.constant 2 : i32
      %71 = arith.addi %21, %c2_i32_60 : i32
      %c0_61 = arith.constant 0 : index
      %72 = arith.index_cast %71 : i32 to index
      %c2_62 = arith.constant 2 : index
      %c0_63 = arith.constant 0 : index
      %73 = vector.load %arg2[%c0_61, %72, %c2_62, %c0_63] : memref<1x32x32x4xbf16, #tpu.memory_space<vmem>>, vector<1x1x30x4xbf16>
      %74 = vector.shape_cast %73 : vector<1x1x30x4xbf16> to vector<30x4xbf16>
      %cst_64 = arith.constant dense<0.000000e+00> : vector<30x128xf32>
      %75 = tpu.matmul %74, %19, %cst_64 {dimension_numbers = #tpu.dot_dimension_numbers<[1], [0], [0], [1], [0, 0, 1, 1], [], []>} : vector<30x4xbf16>, vector<4x128xbf16>, vector<30x128xf32> -> vector<30x128xf32>
      %76 = arith.addf %70, %75 : vector<30x128xf32>
      %c0_65 = arith.constant 0 : index
      %77 = arith.index_cast %arg6 : i32 to index
      %c0_66 = arith.constant 0 : index
      %c0_67 = arith.constant 0 : index
      %78 = vector.load %arg5[%c0_65, %77, %c0_66, %c0_67] : memref<1x30x30x128xf32, #tpu.memory_space<vmem>>, vector<1x1x30x128xf32>
      %79 = vector.shape_cast %78 : vector<1x1x30x128xf32> to vector<30x128xf32>
      %80 = vector.shape_cast %76 : vector<30x128xf32> to vector<1x1x30x128xf32>
      tpu.vector_store %arg5[%c0_65, %77, %c0_66, %c0_67], %80 {strides = array<i32>} : memref<1x30x30x128xf32, #tpu.memory_space<vmem>>, vector<1x1x30x128xf32>,
    }
    %c30_i32_21 = arith.constant 30 : i32
    return
  }
  func.func @transform_0(%arg0: i32, %arg1: i32) -> (i32, i32, i32, i32) {
    %c0_i32 = arith.constant 0 : i32
    %c0_i32_0 = arith.constant 0 : i32
    %c0_i32_1 = arith.constant 0 : i32
    %c0_i32_2 = arith.constant 0 : i32
    return %arg0, %c0_i32, %c0_i32_0, %c0_i32_1 : i32, i32, i32, i32
  }
  func.func @transform_1(%arg0: i32, %arg1: i32) -> (i32, i32, i32) {
    %c0_i32 = arith.constant 0 : i32
    %c0_i32_0 = arith.constant 0 : i32
    %c0_i32_1 = arith.constant 0 : i32
    %c0_i32_2 = arith.constant 0 : i32
    return %c0_i32, %c0_i32_0, %c0_i32_1 : i32, i32, i32
  }
  func.func @transform_2(%arg0: i32, %arg1: i32) -> (i32, i32) {
    %c0_i32 = arith.constant 0 : i32
    %c0_i32_0 = arith.constant 0 : i32
    %c0_i32_1 = arith.constant 0 : i32
    return %c0_i32, %c0_i32_0 : i32, i32
  }
  func.func @transform_3(%arg0: i32, %arg1: i32) -> (i32, i32, i32, i32) {
    %c0_i32 = arith.constant 0 : i32
    %c0_i32_0 = arith.constant 0 : i32
    %c0_i32_1 = arith.constant 0 : i32
    return %arg0, %arg1, %c0_i32, %c0_i32_0 : i32, i32, i32, i32
  }
}

</mosaic_0001>

<llo_original>
// kernel: tpu_custom_call.1
$region0: #{tpu_custom_call.1}
  #allocation0 [shape = 'u32[]', space=smem, size = 0x4, offset = 0x4, fixed_abs, tag = 'smem constant byte address 0x4 - core index']
  #allocation1 [shape = 'u32[144,128]{1,0:T(1,128)}', space=vmem, size = 0x12000, scoped, tag = 'internal scratch']
  %s0 = inlined_call_operand.vmem [shape: bf16[2,32,32,4], index: 0, kind: input, shape index: {}]
  %s1 = inlined_call_operand.vmem [shape: bf16[9,4,128], index: 1, kind: input, shape index: {}]
  %s2 = inlined_call_operand.vmem [shape: f32[1,128], index: 2, kind: input, shape index: {}]
  %s3 = inlined_call_operand.vmem [shape: f32[2,30,30,128], index: 3, kind: output, shape index: {}]
  %s4 = sld [smem:[#allocation0]]
  $region52: #{tpu_custom_call.1} parent=0
    _
  %s6 = ssub.s32 1, %s4
  %s7 = scalar_select 0, %s6, %s4
  loop: start=0, step=1, limit=4
  $region2: #{tpu_custom_call.1} parent=0 // loop_pre_header
    _
  $region3: #{tpu_custom_call.1} parent=0 // loop_header
    %s9 = sphi 0, %s13
    %p10 = scmp.ge.s32.totalorder %s9, 4
    %s16 = sphi 0, %s28
    %s17 = sphi 0, %s24
    %s18 = sphi 0, %s16
    %s19 = sphi 0, %s17
    %s20 = sphi 0, %s18
    %s21 = sphi 0, %s19
    %s31 = sphi 0, %s33
    %s34 = sphi 0, %s31
    %s35 = sphi 0, %s34
    %s51 = sphi 0, %s35
    %s55 = sphi 0, %s55
    %s57 = sphi 0, %s55
    %s58 = sphi 0, %s57
    %s72 = sphi 0, %s58
    %s76 = sphi 0, %s76
    %s78 = sphi 0, %s76
    %s79 = sphi 0, %s78
    %s93 = sphi 0, %s79
    %s101 = sphi 0, %s103
    %s104 = sphi 0, %s101
    %s105 = sphi 0, %s104
    %s121 = sphi 0, %s105
  $region4: #{tpu_custom_call.1} parent=0 // loop_header_branch
    %12 = sbr.rel (%p10) target = $region8
  $region5: #{tpu_custom_call.1} parent=0 // loop_body
    %s14 = ssub.s32 %s9, 1
    %s15 = ssub.s32 %s9, 2
    %s22 = sadd.s32 1, %s17
    %p23 = scmp.ge.s32.totalorder %s22, 1
    %s24 = scalar_select %p23, 0, %s22
    %s25 = sadd.s32 1, %s16
    %s26 = scalar_select %p23, %s25, %s16
    %p27 = scmp.ge.s32.totalorder %s26, 2
    %s28 = scalar_select %p27, 0, %s26
    %s29 = ssub.s32 %s16, %s28
    %p30 = scmp.eq.s32.totalorder %s29, 0
    %s32 = sadd.s32 %s31, 1
    %s33 = scalar_select %p30, %s31, %s32
    %p36 = pneg %p30
    %p37 = scmp.eq.s32.totalorder %s9, 1
    %p38 = por %p36, %p37
    %p39 = scmp.ne.s32.totalorder %s31, %s34
    %p40 = scmp.eq.s32.totalorder %s9, 0
    %p41 = por %p39, %p40
    %p42 = scmp.ne.s32.totalorder %s31, %s34
    %p43 = scmp.eq.s32.totalorder %s14, 1
    %p44 = por %p42, %p43
    %p45 = scmp.ne.s32.totalorder %s34, %s35
    %p46 = scmp.eq.s32.totalorder %s14, 0
    %p47 = por %p45, %p46
    %p48 = scmp.ne.s32.totalorder %s34, %s35
    %p49 = scmp.eq.s32.totalorder %s15, 1
    %p50 = por %p48, %p49
    %p52 = scmp.ne.s32.totalorder %s35, %s51
    %p53 = scmp.eq.s32.totalorder %s15, 0
    %p54 = por %p52, %p53
    %s56 = sadd.s32 %s55, 1
    %p59 = scmp.eq.s32.totalorder %s9, 1
    %p60 = scmp.ne.s32.totalorder %s55, %s57
    %p61 = scmp.eq.s32.totalorder %s9, 0
    %p62 = por %p60, %p61
    %p63 = scmp.ne.s32.totalorder %s55, %s57
    %p64 = scmp.eq.s32.totalorder %s14, 1
    %p65 = por %p63, %p64
    %p66 = scmp.ne.s32.totalorder %s57, %s58
    %p67 = scmp.eq.s32.totalorder %s14, 0
    %p68 = por %p66, %p67
    %p69 = scmp.ne.s32.totalorder %s57, %s58
    %p70 = scmp.eq.s32.totalorder %s15, 1
    %p71 = por %p69, %p70
    %p73 = scmp.ne.s32.totalorder %s58, %s72
    %p74 = scmp.eq.s32.totalorder %s15, 0
    %p75 = por %p73, %p74
    %s77 = sadd.s32 %s76, 1
    %p80 = scmp.eq.s32.totalorder %s9, 1
    %p81 = scmp.ne.s32.totalorder %s76, %s78
    %p82 = scmp.eq.s32.totalorder %s9, 0
    %p83 = por %p81, %p82
    %p84 = scmp.ne.s32.totalorder %s76, %s78
    %p85 = scmp.eq.s32.totalorder %s14, 1
    %p86 = por %p84, %p85
    %p87 = scmp.ne.s32.totalorder %s78, %s79
    %p88 = scmp.eq.s32.totalorder %s14, 0
    %p89 = por %p87, %p88
    %p90 = scmp.ne.s32.totalorder %s78, %s79
    %p91 = scmp.eq.s32.totalorder %s15, 1
    %p92 = por %p90, %p91
    %p94 = scmp.ne.s32.totalorder %s79, %s93
    %p95 = scmp.eq.s32.totalorder %s15, 0
    %p96 = por %p94, %p95
    %s97 = ssub.s32 %s16, %s28
    %s98 = ssub.s32 %s17, %s24
    %s99 = sor.u32 %s97, %s98
    %p100 = scmp.eq.s32.totalorder %s99, 0
    %s102 = sadd.s32 %s101, 1
    %s103 = scalar_select %p100, %s101, %s102
    %p106 = pneg %p100
    %p107 = scmp.eq.s32.totalorder %s9, 1
    %p108 = por %p106, %p107
    %p109 = scmp.ne.s32.totalorder %s101, %s104
    %p110 = scmp.eq.s32.totalorder %s9, 0
    %p111 = por %p109, %p110
    %p112 = scmp.ne.s32.totalorder %s101, %s104
    %p113 = scmp.eq.s32.totalorder %s14, 1
    %p114 = por %p112, %p113
    %p115 = scmp.ne.s32.totalorder %s104, %s105
    %p116 = scmp.eq.s32.totalorder %s14, 0
    %p117 = por %p115, %p116
    %p118 = scmp.ne.s32.totalorder %s104, %s105
    %p119 = scmp.eq.s32.totalorder %s15, 1
    %p120 = por %p118, %p119
    %p122 = scmp.ne.s32.totalorder %s105, %s121
    %p123 = scmp.eq.s32.totalorder %s15, 0
    %p124 = por %p122, %p123
    %p125 = scmp.le.s32.totalorder 1, %s9
    %p126 = scmp.lt.s32.totalorder %s9, 3
    %p127 = pnand %p125, %p126
    %p128 = pneg %p127
    // Predicated region
    $region9: #{tpu_custom_call.1} parent=5 // pred_check
      _
    $region10: #{tpu_custom_call.1} parent=5 // pred_check_branch
      %130 = sbr.rel (%p127) target = $region12
    $region11: #{tpu_custom_call.1} parent=5 // pred_region
      %s131 = ssub.s32 %s9, 1
      // Predicated region
      $region13: #{tpu_custom_call.1} parent=11 // pred_check
        %p132 = pneg %p68
      $region14: #{tpu_custom_call.1} parent=11 // pred_check_branch
        %134 = sbr.rel (%p132) target = $region16
      $region15: #{tpu_custom_call.1} parent=11 // pred_region
        _
      $region16: #{tpu_custom_call.1} parent=11 // pred_fallthru
        _
      // Predicated region
      $region17: #{tpu_custom_call.1} parent=11 // pred_check
        %p135 = pneg %p89
      $region18: #{tpu_custom_call.1} parent=11 // pred_check_branch
        %137 = sbr.rel (%p135) target = $region20
      $region19: #{tpu_custom_call.1} parent=11 // pred_region
        _
      $region20: #{tpu_custom_call.1} parent=11 // pred_fallthru
        _
    $region12: #{tpu_custom_call.1} parent=5 // pred_fallthru
      _
    %p138 = scmp.lt.s32.totalorder %s9, 2
    // Predicated region
    $region21: #{tpu_custom_call.1} parent=5 // pred_check
      %p139 = pneg %p138
    $region22: #{tpu_custom_call.1} parent=5 // pred_check_branch
      %141 = sbr.rel (%p139) target = $region24
    $region23: #{tpu_custom_call.1} parent=5 // pred_region
      // Predicated region
      $region25: #{tpu_custom_call.1} parent=23 // pred_check
        %p142 = pneg %p41
      $region26: #{tpu_custom_call.1} parent=23 // pred_check_branch
        %144 = sbr.rel (%p142) target = $region28
      $region27: #{tpu_custom_call.1} parent=23 // pred_region
        %p145 = scmp.lt.s32.totalorder %s16, 1
        %s146 = scalar_select %p145, %s16, 1
        %s147 = smul.addr %s146, 128
        %s148 = smul.addr %s147, 4
        %s149 = scalar_lea.vmem %s0, %s148
      $region28: #{tpu_custom_call.1} parent=23 // pred_fallthru
        _
    $region24: #{tpu_custom_call.1} parent=5 // pred_fallthru
      _
    %p150 = scmp.le.s32.totalorder 1, %s9
    %p151 = scmp.lt.s32.totalorder %s9, 3
    %p152 = pnand %p150, %p151
    %p153 = pneg %p152
    // Predicated region
    $region29: #{tpu_custom_call.1} parent=5 // pred_check
      _
    $region30: #{tpu_custom_call.1} parent=5 // pred_check_branch
      %155 = sbr.rel (%p152) target = $region32
    $region31: #{tpu_custom_call.1} parent=5 // pred_region
      %s156 = ssub.s32 %s9, 1
      %p157 = scmp.lt.s32.totalorder %s18, 1
      %s158 = scalar_select %p157, %s18, 1
      %s159 = smul.addr %s158, 128
      %s160 = smul.addr %s159, 4
      %s161 = scalar_lea.vmem %s0, %s160
      %p162 = pneg %p47
      %p163 = pneg %p44
      %p164 = pneg %p68
      %p165 = pneg %p65
      %p166 = pneg %p89
      %p167 = pneg %p86
      %p168 = pneg %p117
      %p169 = pneg %p114
      %s170 = smul.u32 30, %s19
      %p171 = scmp.lt.s32.totalorder %s18, 1
      %s172 = scalar_select %p171, %s18, 1
      %p173 = scmp.lt.s32.totalorder %s170, 29
      %s174 = scalar_select %p173, %s170, 29
      %s175 = smul.addr %s174, 4
      %s176 = smul.addr %s172, 120
      %s177 = sadd.s32 %s175, %s176
      %s178 = smul.addr %s177, 8
      %s179 = scalar_lea.vmem %s3, %s178
      %p180 = scmp.lt.s32.totalorder %s18, 1
      %s181 = scalar_select %p180, %s18, 1
      %s182 = smul.addr %s181, 128
      %s183 = smul.addr %s182, 4
      %s184 = scalar_lea.vmem %s0, %s183
      %s185 = smul.u32 30, %s19
      %p186 = scmp.lt.s32.totalorder %s18, 1
      %s187 = scalar_select %p186, %s18, 1
      %p188 = scmp.lt.s32.totalorder %s185, 29
      %s189 = scalar_select %p188, %s185, 29
      %s190 = smul.addr %s189, 4
      %s191 = smul.addr %s187, 120
      %s192 = sadd.s32 %s190, %s191
      %s193 = smul.addr %s192, 8
      %s194 = scalar_lea.vmem %s3, %s193
      %s195 = smul.u32 30, %s19
      %s197 = smul.u32 %s19, 30
      %v198 = vld [vmem:[%s2] sm:$0x1]
      %v199 = vld [vmem:[%s1] sm:$0x3]
      %s200 = scalar_lea.vmem %s1, 2
      %v201 = vld [vmem:[%s200] sm:$0x3]
      %s202 = scalar_lea.vmem %s1, 4
      %v203 = vld [vmem:[%s202] sm:$0x3]
      %s204 = scalar_lea.vmem %s1, 6
      %v205 = vld [vmem:[%s204] sm:$0x3]
      %s206 = scalar_lea.vmem %s1, 8
      %v207 = vld [vmem:[%s206] sm:$0x3]
      %s208 = scalar_lea.vmem %s1, 10
      %v209 = vld [vmem:[%s208] sm:$0x3]
      %s210 = scalar_lea.vmem %s1, 12
      %v211 = vld [vmem:[%s210] sm:$0x3]
      %s212 = scalar_lea.vmem %s1, 14
      %v213 = vld [vmem:[%s212] sm:$0x3]
      %s214 = scalar_lea.vmem %s1, 16
      %v215 = vld [vmem:[%s214] sm:$0x3]
      loop: start=0, step=1, limit=30
      $region33: #{tpu_custom_call.1} parent=31 // loop_pre_header
        _
      $region34: #{tpu_custom_call.1} parent=31 // loop_header
        %s217 = sphi 0, %s221
        %p218 = scmp.ge.s32.totalorder %s217, 30
      $region35: #{tpu_custom_call.1} parent=31 // loop_header_branch
        %220 = sbr.rel (%p218) target = $region39
      $region36: #{tpu_custom_call.1} parent=31 // loop_body
        %s222 = sadd.s32 %s197, %s217
        %s223 = smul.u32 %s222, 4
        %s224 = smul.addr %s223, 4
        %s225 = scalar_lea.vmem %s184, %s224
        %v226 = vld [vmem:[%s225] sm:$0xf]
        %v227 = vld [vmem:[%s225 + $0x4] sm:$0xf]
        %v228 = vld [vmem:[%s225 + $0x8] sm:$0xf]
        %v229 = vld [vmem:[%s225 + $0xc] sm:$0x7]
        %v234 = vunpack.c.l.b16 %v226
        %v235 = vunpack.c.l.b16 %v227
        %v236 = vunpack.c.l.b16 %v228
        %v237 = vunpack.c.l.b16 %v229
        %v238 = vpack.c.b16 %v235, %v234
        %v239 = vpack.c.b16 %v237, %v236
        %vm240 = vcmask 31744
        %v242 = vsel %vm240, %v238, 0
        %v245 = vsel %vm240, %v239, 0
        %vm247 = vcmask 1041408
        %v249 = vsel %vm247, %v199, 0
        %251 = vmatprep.subr.bf16.mxu0 0
        %252 = vmatpush1.bf16.msra.mxu0 %v249
        %253 = vmatprep.subr.bf16.mxu0 0
        %254 = vmatpush1.bf16.msra.mxu0 0
        %255 = vmatprep.subr.bf16.mxu0 0
        %256 = vmatpush1.bf16.msra.mxu0 0
        %257 = vmatprep.subr.bf16.mxu0 0
        %258 = vmatpush1.bf16.msra.mxu0 0
        %259 = vmatprep.subr.bf16.mxu0 0
        %260 = vmatpush1.bf16.msra.mxu0 0
        %261 = vmatprep.subr.bf16.mxu0 0
        %262 = vmatpush1.bf16.msra.mxu0 0
        %263 = vmatprep.subr.bf16.mxu0 0
        %264 = vmatpush1.bf16.msra.mxu0 0
        %265 = vmatprep.subr.bf16.mxu0 0
        %266 = vmatpush1.bf16.msra.mxu0 0
        %267 = vmatprep.subr.bf16.mxu0 0
        %268 = vmatpush1.bf16.msra.mxu0 0
        %269 = vmatprep.subr.bf16.mxu0 0
        %270 = vmatpush1.bf16.msra.mxu0 0
        %271 = vmatprep.subr.bf16.mxu0 0
        %272 = vmatpush1.bf16.msra.mxu0 0
        %273 = vmatprep.subr.bf16.mxu0 0
        %274 = vmatpush1.bf16.msra.mxu0 0
        %275 = vmatprep.subr.bf16.mxu0 0
        %276 = vmatpush1.bf16.msra.mxu0 0
        %277 = vmatprep.subr.bf16.mxu0 0
        %278 = vmatpush1.bf16.msra.mxu0 0
        %279 = vmatprep.subr.bf16.mxu0 0
        %280 = vmatpush1.bf16.msra.mxu0 0
        %281 = vmatprep.subr.bf16.mxu0 0
        %282 = vmatpush1.bf16.msra.mxu0 0
        %283 = vmatprep.mubr.bf16.mxu0 0
        %284 = vmatmul.mubr.bf16.gmra.mrb[0].mxu0 %v242
        %v285 = vpop.f32.mrb[0].mxu0
        %v286 = vadd.f32 0.0, %v285
        %v287 = vpop.f32.mrb[0].mxu0
        %v288 = vpop.f32.mrb[0].mxu0
        %v289 = vadd.f32 0.0, %v288
        %v290 = vpop.f32.mrb[0].mxu0
        %291 = vmatprep.mubr.bf16.mxu0 0
        %292 = vmatmul.mubr.bf16.gmra.mrb[0].mxu0 %v245
        %v293 = vpop.f32.mrb[0].mxu0
        %v294 = vadd.f32 0.0, %v293
        %v295 = vpop.f32.mrb[0].mxu0
        %v296 = vpop.f32.mrb[0].mxu0
        %v297 = vadd.f32 0.0, %v296
        %v298 = vpop.f32.mrb[0].mxu0
        %299 = vdwg.mxu0
        %v301 = vlaneseq
        %v302 = vshrl.u32 %v301, 7
        %v303 = vsub.s32 0, %v302
        %v304 = vrot.slane %v198, %v303
        %v306 = vadd.f32 %v304, %v286
        %v307 = vadd.f32 %v304, %v289
        %v308 = vadd.f32 %v304, %v294
        %v309 = vadd.f32 %v304, %v297
        %v310 = vld [vmem:[%s225 + $0xc] sm:$0xf]
        %v312 = vunpack.c.l.b16 %v310
        %v313 = vpack.c.b16 %v312, %v236
        %vm314 = vsmask.f32 7424
        %v315 = vshrl.u32 %v238, 16
        %v317 = vshll.u32 %v238, 16
        %v319 = vrot.slane %v317, 1
        %v320 = vor.u32 %v315, %v319
        %v322 = vshll.u32 %v313, 16
        %v324 = vrot.slane %v322, 1
        %v325 = vsel %vm314, %v320, %v324
        %v326 = vshrl.u32 %v313, 16
        %v328 = vor.u32 %v326, %v324
        %v330 = vsel %vm240, %v325, 0
        %v333 = vsel %vm240, %v328, 0
        %v336 = vsel %vm247, %v201, 0
        %338 = vmatprep.subr.bf16.mxu0 0
        %339 = vmatpush1.bf16.msra.mxu0 %v336
        %340 = vmatprep.subr.bf16.mxu0 0
        %341 = vmatpush1.bf16.msra.mxu0 0
        %342 = vmatprep.subr.bf16.mxu0 0
        %343 = vmatpush1.bf16.msra.mxu0 0
        %344 = vmatprep.subr.bf16.mxu0 0
        %345 = vmatpush1.bf16.msra.mxu0 0
        %346 = vmatprep.subr.bf16.mxu0 0
        %347 = vmatpush1.bf16.msra.mxu0 0
        %348 = vmatprep.subr.bf16.mxu0 0
        %349 = vmatpush1.bf16.msra.mxu0 0
        %350 = vmatprep.subr.bf16.mxu0 0
        %351 = vmatpush1.bf16.msra.mxu0 0
        %352 = vmatprep.subr.bf16.mxu0 0
        %353 = vmatpush1.bf16.msra.mxu0 0
        %354 = vmatprep.subr.bf16.mxu0 0
        %355 = vmatpush1.bf16.msra.mxu0 0
        %356 = vmatprep.subr.bf16.mxu0 0
        %357 = vmatpush1.bf16.msra.mxu0 0
        %358 = vmatprep.subr.bf16.mxu0 0
        %359 = vmatpush1.bf16.msra.mxu0 0
        %360 = vmatprep.subr.bf16.mxu0 0
        %361 = vmatpush1.bf16.msra.mxu0 0
        %362 = vmatprep.subr.bf16.mxu0 0
        %363 = vmatpush1.bf16.msra.mxu0 0
        %364 = vmatprep.subr.bf16.mxu0 0
        %365 = vmatpush1.bf16.msra.mxu0 0
        %366 = vmatprep.subr.bf16.mxu0 0
        %367 = vmatpush1.bf16.msra.mxu0 0
        %368 = vmatprep.subr.bf16.mxu0 0
        %369 = vmatpush1.bf16.msra.mxu0 0
        %370 = vmatprep.mubr.bf16.mxu0 0
        %371 = vmatmul.mubr.bf16.gmra.mrb[0].mxu0 %v330
        %v372 = vpop.f32.mrb[0].mxu0
        %v373 = vadd.f32 0.0, %v372
        %v374 = vpop.f32.mrb[0].mxu0
        %v375 = vpop.f32.mrb[0].mxu0
        %v376 = vadd.f32 0.0, %v375
        %v377 = vpop.f32.mrb[0].mxu0
        %378 = vmatprep.mubr.bf16.mxu0 0
        %379 = vmatmul.mubr.bf16.gmra.mrb[0].mxu0 %v333
        %v380 = vpop.f32.mrb[0].mxu0
        %v381 = vadd.f32 0.0, %v380
        %v382 = vpop.f32.mrb[0].mxu0
        %v383 = vpop.f32.mrb[0].mxu0
        %v384 = vadd.f32 0.0, %v383
        %v385 = vpop.f32.mrb[0].mxu0
        %386 = vdwg.mxu0
        %v387 = vadd.f32 %v306, %v373
        %v388 = vadd.f32 %v307, %v376
        %v389 = vadd.f32 %v308, %v381
        %v390 = vadd.f32 %v309, %v384
        %v391 = vld [vmem:[%s225] sm:$0xe]
        %v393 = vunpack.c.l.b16 %v391
        %v394 = vpack.c.b16 %v235, %v393
        %vm395 = vcmask 1046528
        %v396 = vrot.slane %v394, 1
        %v397 = vrot.slane %v313, 1
        %v398 = vsel %vm395, %v396, %v397
        %v400 = vsel %vm240, %v398, 0
        %v403 = vsel %vm240, %v397, 0
        %v406 = vsel %vm247, %v203, 0
        %408 = vmatprep.subr.bf16.mxu0 0
        %409 = vmatpush1.bf16.msra.mxu0 %v406
        %410 = vmatprep.subr.bf16.mxu0 0
        %411 = vmatpush1.bf16.msra.mxu0 0
        %412 = vmatprep.subr.bf16.mxu0 0
        %413 = vmatpush1.bf16.msra.mxu0 0
        %414 = vmatprep.subr.bf16.mxu0 0
        %415 = vmatpush1.bf16.msra.mxu0 0
        %416 = vmatprep.subr.bf16.mxu0 0
        %417 = vmatpush1.bf16.msra.mxu0 0
        %418 = vmatprep.subr.bf16.mxu0 0
        %419 = vmatpush1.bf16.msra.mxu0 0
        %420 = vmatprep.subr.bf16.mxu0 0
        %421 = vmatpush1.bf16.msra.mxu0 0
        %422 = vmatprep.subr.bf16.mxu0 0
        %423 = vmatpush1.bf16.msra.mxu0 0
        %424 = vmatprep.subr.bf16.mxu0 0
        %425 = vmatpush1.bf16.msra.mxu0 0
        %426 = vmatprep.subr.bf16.mxu0 0
        %427 = vmatpush1.bf16.msra.mxu0 0
        %428 = vmatprep.subr.bf16.mxu0 0
        %429 = vmatpush1.bf16.msra.mxu0 0
        %430 = vmatprep.subr.bf16.mxu0 0
        %431 = vmatpush1.bf16.msra.mxu0 0
        %432 = vmatprep.subr.bf16.mxu0 0
        %433 = vmatpush1.bf16.msra.mxu0 0
        %434 = vmatprep.subr.bf16.mxu0 0
        %435 = vmatpush1.bf16.msra.mxu0 0
        %436 = vmatprep.subr.bf16.mxu0 0
        %437 = vmatpush1.bf16.msra.mxu0 0
        %438 = vmatprep.subr.bf16.mxu0 0
        %439 = vmatpush1.bf16.msra.mxu0 0
        %440 = vmatprep.mubr.bf16.mxu0 0
        %441 = vmatmul.mubr.bf16.gmra.mrb[0].mxu0 %v400
        %v442 = vpop.f32.mrb[0].mxu0
        %v443 = vadd.f32 0.0, %v442
        %v444 = vpop.f32.mrb[0].mxu0
        %v445 = vpop.f32.mrb[0].mxu0
        %v446 = vadd.f32 0.0, %v445
        %v447 = vpop.f32.mrb[0].mxu0
        %448 = vmatprep.mubr.bf16.mxu0 0
        %449 = vmatmul.mubr.bf16.gmra.mrb[0].mxu0 %v403
        %v450 = vpop.f32.mrb[0].mxu0
        %v451 = vadd.f32 0.0, %v450
        %v452 = vpop.f32.mrb[0].mxu0
        %v453 = vpop.f32.mrb[0].mxu0
        %v454 = vadd.f32 0.0, %v453
        %v455 = vpop.f32.mrb[0].mxu0
        %456 = vdwg.mxu0
        %v457 = vadd.f32 %v387, %v443
        %v458 = vadd.f32 %v388, %v446
        %v459 = vadd.f32 %v389, %v451
        %v460 = vadd.f32 %v390, %v454
        %s461 = sadd.s32 %s222, 1
        %s462 = smul.u32 %s461, 4
        %s463 = smul.addr %s462, 4
        %s464 = scalar_lea.vmem %s184, %s463
        %v465 = vld [vmem:[%s464] sm:$0xf]
        %v466 = vld [vmem:[%s464 + $0x4] sm:$0xf]
        %v467 = vld [vmem:[%s464 + $0x8] sm:$0xf]
        %v468 = vld [vmem:[%s464 + $0xc] sm:$0x7]
        %v473 = vunpack.c.l.b16 %v465
        %v474 = vunpack.c.l.b16 %v466
        %v475 = vunpack.c.l.b16 %v467
        %v476 = vunpack.c.l.b16 %v468
        %v477 = vpack.c.b16 %v474, %v473
        %v478 = vpack.c.b16 %v476, %v475
        %v480 = vsel %vm240, %v477, 0
        %v483 = vsel %vm240, %v478, 0
        %v486 = vsel %vm247, %v205, 0
        %488 = vmatprep.subr.bf16.mxu0 0
        %489 = vmatpush1.bf16.msra.mxu0 %v486
        %490 = vmatprep.subr.bf16.mxu0 0
        %491 = vmatpush1.bf16.msra.mxu0 0
        %492 = vmatprep.subr.bf16.mxu0 0
        %493 = vmatpush1.bf16.msra.mxu0 0
        %494 = vmatprep.subr.bf16.mxu0 0
        %495 = vmatpush1.bf16.msra.mxu0 0
        %496 = vmatprep.subr.bf16.mxu0 0
        %497 = vmatpush1.bf16.msra.mxu0 0
        %498 = vmatprep.subr.bf16.mxu0 0
        %499 = vmatpush1.bf16.msra.mxu0 0
        %500 = vmatprep.subr.bf16.mxu0 0
        %501 = vmatpush1.bf16.msra.mxu0 0
        %502 = vmatprep.subr.bf16.mxu0 0
        %503 = vmatpush1.bf16.msra.mxu0 0
        %504 = vmatprep.subr.bf16.mxu0 0
        %505 = vmatpush1.bf16.msra.mxu0 0
        %506 = vmatprep.subr.bf16.mxu0 0
        %507 = vmatpush1.bf16.msra.mxu0 0
        %508 = vmatprep.subr.bf16.mxu0 0
        %509 = vmatpush1.bf16.msra.mxu0 0
        %510 = vmatprep.subr.bf16.mxu0 0
        %511 = vmatpush1.bf16.msra.mxu0 0
        %512 = vmatprep.subr.bf16.mxu0 0
        %513 = vmatpush1.bf16.msra.mxu0 0
        %514 = vmatprep.subr.bf16.mxu0 0
        %515 = vmatpush1.bf16.msra.mxu0 0
        %516 = vmatprep.subr.bf16.mxu0 0
        %517 = vmatpush1.bf16.msra.mxu0 0
        %518 = vmatprep.subr.bf16.mxu0 0
        %519 = vmatpush1.bf16.msra.mxu0 0
        %520 = vmatprep.mubr.bf16.mxu0 0
        %521 = vmatmul.mubr.bf16.gmra.mrb[0].mxu0 %v480
        %v522 = vpop.f32.mrb[0].mxu0
        %v523 = vadd.f32 0.0, %v522
        %v524 = vpop.f32.mrb[0].mxu0
        %v525 = vpop.f32.mrb[0].mxu0
        %v526 = vadd.f32 0.0, %v525
        %v527 = vpop.f32.mrb[0].mxu0
        %528 = vmatprep.mubr.bf16.mxu0 0
        %529 = vmatmul.mubr.bf16.gmra.mrb[0].mxu0 %v483
        %v530 = vpop.f32.mrb[0].mxu0
        %v531 = vadd.f32 0.0, %v530
        %v532 = vpop.f32.mrb[0].mxu0
        %v533 = vpop.f32.mrb[0].mxu0
        %v534 = vadd.f32 0.0, %v533
        %v535 = vpop.f32.mrb[0].mxu0
        %536 = vdwg.mxu0
        %v537 = vadd.f32 %v457, %v523
        %v538 = vadd.f32 %v458, %v526
        %v539 = vadd.f32 %v459, %v531
        %v540 = vadd.f32 %v460, %v534
        %v541 = vld [vmem:[%s464 + $0xc] sm:$0xf]
        %v543 = vunpack.c.l.b16 %v541
        %v544 = vpack.c.b16 %v543, %v475
        %v545 = vshrl.u32 %v477, 16
        %v547 = vshll.u32 %v477, 16
        %v549 = vrot.slane %v547, 1
        %v550 = vor.u32 %v545, %v549
        %v552 = vshll.u32 %v544, 16
        %v554 = vrot.slane %v552, 1
        %v555 = vsel %vm314, %v550, %v554
        %v556 = vshrl.u32 %v544, 16
        %v558 = vor.u32 %v556, %v554
        %v560 = vsel %vm240, %v555, 0
        %v563 = vsel %vm240, %v558, 0
        %v566 = vsel %vm247, %v207, 0
        %568 = vmatprep.subr.bf16.mxu0 0
        %569 = vmatpush1.bf16.msra.mxu0 %v566
        %570 = vmatprep.subr.bf16.mxu0 0
        %571 = vmatpush1.bf16.msra.mxu0 0
        %572 = vmatprep.subr.bf16.mxu0 0
        %573 = vmatpush1.bf16.msra.mxu0 0
        %574 = vmatprep.subr.bf16.mxu0 0
        %575 = vmatpush1.bf16.msra.mxu0 0
        %576 = vmatprep.subr.bf16.mxu0 0
        %577 = vmatpush1.bf16.msra.mxu0 0
        %578 = vmatprep.subr.bf16.mxu0 0
        %579 = vmatpush1.bf16.msra.mxu0 0
        %580 = vmatprep.subr.bf16.mxu0 0
        %581 = vmatpush1.bf16.msra.mxu0 0
        %582 = vmatprep.subr.bf16.mxu0 0
        %583 = vmatpush1.bf16.msra.mxu0 0
        %584 = vmatprep.subr.bf16.mxu0 0
        %585 = vmatpush1.bf16.msra.mxu0 0
        %586 = vmatprep.subr.bf16.mxu0 0
        %587 = vmatpush1.bf16.msra.mxu0 0
        %588 = vmatprep.subr.bf16.mxu0 0
        %589 = vmatpush1.bf16.msra.mxu0 0
        %590 = vmatprep.subr.bf16.mxu0 0
        %591 = vmatpush1.bf16.msra.mxu0 0
        %592 = vmatprep.subr.bf16.mxu0 0
        %593 = vmatpush1.bf16.msra.mxu0 0
        %594 = vmatprep.subr.bf16.mxu0 0
        %595 = vmatpush1.bf16.msra.mxu0 0
        %596 = vmatprep.subr.bf16.mxu0 0
        %597 = vmatpush1.bf16.msra.mxu0 0
        %598 = vmatprep.subr.bf16.mxu0 0
        %599 = vmatpush1.bf16.msra.mxu0 0
        %600 = vmatprep.mubr.bf16.mxu0 0
        %601 = vmatmul.mubr.bf16.gmra.mrb[0].mxu0 %v560
        %v602 = vpop.f32.mrb[0].mxu0
        %v603 = vadd.f32 0.0, %v602
        %v604 = vpop.f32.mrb[0].mxu0
        %v605 = vpop.f32.mrb[0].mxu0
        %v606 = vadd.f32 0.0, %v605
        %v607 = vpop.f32.mrb[0].mxu0
        %608 = vmatprep.mubr.bf16.mxu0 0
        %609 = vmatmul.mubr.bf16.gmra.mrb[0].mxu0 %v563
        %v610 = vpop.f32.mrb[0].mxu0
        %v611 = vadd.f32 0.0, %v610
        %v612 = vpop.f32.mrb[0].mxu0
        %v613 = vpop.f32.mrb[0].mxu0
        %v614 = vadd.f32 0.0, %v613
        %v615 = vpop.f32.mrb[0].mxu0
        %616 = vdwg.mxu0
        %v617 = vadd.f32 %v537, %v603
        %v618 = vadd.f32 %v538, %v606
        %v619 = vadd.f32 %v539, %v611
        %v620 = vadd.f32 %v540, %v614
        %v621 = vld [vmem:[%s464] sm:$0xe]
        %v623 = vunpack.c.l.b16 %v621
        %v624 = vpack.c.b16 %v474, %v623
        %v625 = vrot.slane %v624, 1
        %v626 = vrot.slane %v544, 1
        %v627 = vsel %vm395, %v625, %v626
        %v629 = vsel %vm240, %v627, 0
        %v632 = vsel %vm240, %v626, 0
        %v635 = vsel %vm247, %v209, 0
        %637 = vmatprep.subr.bf16.mxu0 0
        %638 = vmatpush1.bf16.msra.mxu0 %v635
        %639 = vmatprep.subr.bf16.mxu0 0
        %640 = vmatpush1.bf16.msra.mxu0 0
        %641 = vmatprep.subr.bf16.mxu0 0
        %642 = vmatpush1.bf16.msra.mxu0 0
        %643 = vmatprep.subr.bf16.mxu0 0
        %644 = vmatpush1.bf16.msra.mxu0 0
        %645 = vmatprep.subr.bf16.mxu0 0
        %646 = vmatpush1.bf16.msra.mxu0 0
        %647 = vmatprep.subr.bf16.mxu0 0
        %648 = vmatpush1.bf16.msra.mxu0 0
        %649 = vmatprep.subr.bf16.mxu0 0
        %650 = vmatpush1.bf16.msra.mxu0 0
        %651 = vmatprep.subr.bf16.mxu0 0
        %652 = vmatpush1.bf16.msra.mxu0 0
        %653 = vmatprep.subr.bf16.mxu0 0
        %654 = vmatpush1.bf16.msra.mxu0 0
        %655 = vmatprep.subr.bf16.mxu0 0
        %656 = vmatpush1.bf16.msra.mxu0 0
        %657 = vmatprep.subr.bf16.mxu0 0
        %658 = vmatpush1.bf16.msra.mxu0 0
        %659 = vmatprep.subr.bf16.mxu0 0
        %660 = vmatpush1.bf16.msra.mxu0 0
        %661 = vmatprep.subr.bf16.mxu0 0
        %662 = vmatpush1.bf16.msra.mxu0 0
        %663 = vmatprep.subr.bf16.mxu0 0
        %664 = vmatpush1.bf16.msra.mxu0 0
        %665 = vmatprep.subr.bf16.mxu0 0
        %666 = vmatpush1.bf16.msra.mxu0 0
        %667 = vmatprep.subr.bf16.mxu0 0
        %668 = vmatpush1.bf16.msra.mxu0 0
        %669 = vmatprep.mubr.bf16.mxu0 0
        %670 = vmatmul.mubr.bf16.gmra.mrb[0].mxu0 %v629
        %v671 = vpop.f32.mrb[0].mxu0
        %v672 = vadd.f32 0.0, %v671
        %v673 = vpop.f32.mrb[0].mxu0
        %v674 = vpop.f32.mrb[0].mxu0
        %v675 = vadd.f32 0.0, %v674
        %v676 = vpop.f32.mrb[0].mxu0
        %677 = vmatprep.mubr.bf16.mxu0 0
        %678 = vmatmul.mubr.bf16.gmra.mrb[0].mxu0 %v632
        %v679 = vpop.f32.mrb[0].mxu0
        %v680 = vadd.f32 0.0, %v679
        %v681 = vpop.f32.mrb[0].mxu0
        %v682 = vpop.f32.mrb[0].mxu0
        %v683 = vadd.f32 0.0, %v682
        %v684 = vpop.f32.mrb[0].mxu0
        %685 = vdwg.mxu0
        %v686 = vadd.f32 %v617, %v672
        %v687 = vadd.f32 %v618, %v675
        %v688 = vadd.f32 %v619, %v680
        %v689 = vadd.f32 %v620, %v683
        %s690 = sadd.s32 %s222, 2
        %s691 = smul.u32 %s690, 4
        %s692 = smul.addr %s691, 4
        %s693 = scalar_lea.vmem %s184, %s692
        %v694 = vld [vmem:[%s693] sm:$0xf]
        %v695 = vld [vmem:[%s693 + $0x4] sm:$0xf]
        %v696 = vld [vmem:[%s693 + $0x8] sm:$0xf]
        %v697 = vld [vmem:[%s693 + $0xc] sm:$0x7]
        %v702 = vunpack.c.l.b16 %v694
        %v703 = vunpack.c.l.b16 %v695
        %v704 = vunpack.c.l.b16 %v696
        %v705 = vunpack.c.l.b16 %v697
        %v706 = vpack.c.b16 %v703, %v702
        %v707 = vpack.c.b16 %v705, %v704
        %v709 = vsel %vm240, %v706, 0
        %v712 = vsel %vm240, %v707, 0
        %v715 = vsel %vm247, %v211, 0
        %717 = vmatprep.subr.bf16.mxu0 0
        %718 = vmatpush1.bf16.msra.mxu0 %v715
        %719 = vmatprep.subr.bf16.mxu0 0
        %720 = vmatpush1.bf16.msra.mxu0 0
        %721 = vmatprep.subr.bf16.mxu0 0
        %722 = vmatpush1.bf16.msra.mxu0 0
        %723 = vmatprep.subr.bf16.mxu0 0
        %724 = vmatpush1.bf16.msra.mxu0 0
        %725 = vmatprep.subr.bf16.mxu0 0
        %726 = vmatpush1.bf16.msra.mxu0 0
        %727 = vmatprep.subr.bf16.mxu0 0
        %728 = vmatpush1.bf16.msra.mxu0 0
        %729 = vmatprep.subr.bf16.mxu0 0
        %730 = vmatpush1.bf16.msra.mxu0 0
        %731 = vmatprep.subr.bf16.mxu0 0
        %732 = vmatpush1.bf16.msra.mxu0 0
        %733 = vmatprep.subr.bf16.mxu0 0
        %734 = vmatpush1.bf16.msra.mxu0 0
        %735 = vmatprep.subr.bf16.mxu0 0
        %736 = vmatpush1.bf16.msra.mxu0 0
        %737 = vmatprep.subr.bf16.mxu0 0
        %738 = vmatpush1.bf16.msra.mxu0 0
        %739 = vmatprep.subr.bf16.mxu0 0
        %740 = vmatpush1.bf16.msra.mxu0 0
        %741 = vmatprep.subr.bf16.mxu0 0
        %742 = vmatpush1.bf16.msra.mxu0 0
        %743 = vmatprep.subr.bf16.mxu0 0
        %744 = vmatpush1.bf16.msra.mxu0 0
        %745 = vmatprep.subr.bf16.mxu0 0
        %746 = vmatpush1.bf16.msra.mxu0 0
        %747 = vmatprep.subr.bf16.mxu0 0
        %748 = vmatpush1.bf16.msra.mxu0 0
        %749 = vmatprep.mubr.bf16.mxu0 0
        %750 = vmatmul.mubr.bf16.gmra.mrb[0].mxu0 %v709
        %v751 = vpop.f32.mrb[0].mxu0
        %v752 = vadd.f32 0.0, %v751
        %v753 = vpop.f32.mrb[0].mxu0
        %v754 = vpop.f32.mrb[0].mxu0
        %v755 = vadd.f32 0.0, %v754
        %v756 = vpop.f32.mrb[0].mxu0
        %757 = vmatprep.mubr.bf16.mxu0 0
        %758 = vmatmul.mubr.bf16.gmra.mrb[0].mxu0 %v712
        %v759 = vpop.f32.mrb[0].mxu0
        %v760 = vadd.f32 0.0, %v759
        %v761 = vpop.f32.mrb[0].mxu0
        %v762 = vpop.f32.mrb[0].mxu0
        %v763 = vadd.f32 0.0, %v762
        %v764 = vpop.f32.mrb[0].mxu0
        %765 = vdwg.mxu0
        %v766 = vadd.f32 %v686, %v752
        %v767 = vadd.f32 %v687, %v755
        %v768 = vadd.f32 %v688, %v760
        %v769 = vadd.f32 %v689, %v763
        %v770 = vld [vmem:[%s693 + $0xc] sm:$0xf]
        %v772 = vunpack.c.l.b16 %v770
        %v773 = vpack.c.b16 %v772, %v704
        %v774 = vshrl.u32 %v706, 16
        %v776 = vshll.u32 %v706, 16
        %v778 = vrot.slane %v776, 1
        %v779 = vor.u32 %v774, %v778
        %v781 = vshll.u32 %v773, 16
        %v783 = vrot.slane %v781, 1
        %v784 = vsel %vm314, %v779, %v783
        %v785 = vshrl.u32 %v773, 16
        %v787 = vor.u32 %v785, %v783
        %v789 = vsel %vm240, %v784, 0
        %v792 = vsel %vm240, %v787, 0
        %v795 = vsel %vm247, %v213, 0
        %797 = vmatprep.subr.bf16.mxu0 0
        %798 = vmatpush1.bf16.msra.mxu0 %v795
        %799 = vmatprep.subr.bf16.mxu0 0
        %800 = vmatpush1.bf16.msra.mxu0 0
        %801 = vmatprep.subr.bf16.mxu0 0
        %802 = vmatpush1.bf16.msra.mxu0 0
        %803 = vmatprep.subr.bf16.mxu0 0
        %804 = vmatpush1.bf16.msra.mxu0 0
        %805 = vmatprep.subr.bf16.mxu0 0
        %806 = vmatpush1.bf16.msra.mxu0 0
        %807 = vmatprep.subr.bf16.mxu0 0
        %808 = vmatpush1.bf16.msra.mxu0 0
        %809 = vmatprep.subr.bf16.mxu0 0
        %810 = vmatpush1.bf16.msra.mxu0 0
        %811 = vmatprep.subr.bf16.mxu0 0
        %812 = vmatpush1.bf16.msra.mxu0 0
        %813 = vmatprep.subr.bf16.mxu0 0
        %814 = vmatpush1.bf16.msra.mxu0 0
        %815 = vmatprep.subr.bf16.mxu0 0
        %816 = vmatpush1.bf16.msra.mxu0 0
        %817 = vmatprep.subr.bf16.mxu0 0
        %818 = vmatpush1.bf16.msra.mxu0 0
        %819 = vmatprep.subr.bf16.mxu0 0
        %820 = vmatpush1.bf16.msra.mxu0 0
        %821 = vmatprep.subr.bf16.mxu0 0
        %822 = vmatpush1.bf16.msra.mxu0 0
        %823 = vmatprep.subr.bf16.mxu0 0
        %824 = vmatpush1.bf16.msra.mxu0 0
        %825 = vmatprep.subr.bf16.mxu0 0
        %826 = vmatpush1.bf16.msra.mxu0 0
        %827 = vmatprep.subr.bf16.mxu0 0
        %828 = vmatpush1.bf16.msra.mxu0 0
        %829 = vmatprep.mubr.bf16.mxu0 0
        %830 = vmatmul.mubr.bf16.gmra.mrb[0].mxu0 %v789
        %v831 = vpop.f32.mrb[0].mxu0
        %v832 = vadd.f32 0.0, %v831
        %v833 = vpop.f32.mrb[0].mxu0
        %v834 = vpop.f32.mrb[0].mxu0
        %v835 = vadd.f32 0.0, %v834
        %v836 = vpop.f32.mrb[0].mxu0
        %837 = vmatprep.mubr.bf16.mxu0 0
        %838 = vmatmul.mubr.bf16.gmra.mrb[0].mxu0 %v792
        %v839 = vpop.f32.mrb[0].mxu0
        %v840 = vadd.f32 0.0, %v839
        %v841 = vpop.f32.mrb[0].mxu0
        %v842 = vpop.f32.mrb[0].mxu0
        %v843 = vadd.f32 0.0, %v842
        %v844 = vpop.f32.mrb[0].mxu0
        %845 = vdwg.mxu0
        %v846 = vadd.f32 %v766, %v832
        %v847 = vadd.f32 %v767, %v835
        %v848 = vadd.f32 %v768, %v840
        %v849 = vadd.f32 %v769, %v843
        %v850 = vld [vmem:[%s693] sm:$0xe]
        %v852 = vunpack.c.l.b16 %v850
        %v853 = vpack.c.b16 %v703, %v852
        %v854 = vrot.slane %v853, 1
        %v855 = vrot.slane %v773, 1
        %v856 = vsel %vm395, %v854, %v855
        %v858 = vsel %vm240, %v856, 0
        %v861 = vsel %vm240, %v855, 0
        %v864 = vsel %vm247, %v215, 0
        %866 = vmatprep.subr.bf16.mxu0 0
        %867 = vmatpush1.bf16.msra.mxu0 %v864
        %868 = vmatprep.subr.bf16.mxu0 0
        %869 = vmatpush1.bf16.msra.mxu0 0
        %870 = vmatprep.subr.bf16.mxu0 0
        %871 = vmatpush1.bf16.msra.mxu0 0
        %872 = vmatprep.subr.bf16.mxu0 0
        %873 = vmatpush1.bf16.msra.mxu0 0
        %874 = vmatprep.subr.bf16.mxu0 0
        %875 = vmatpush1.bf16.msra.mxu0 0
        %876 = vmatprep.subr.bf16.mxu0 0
        %877 = vmatpush1.bf16.msra.mxu0 0
        %878 = vmatprep.subr.bf16.mxu0 0
        %879 = vmatpush1.bf16.msra.mxu0 0
        %880 = vmatprep.subr.bf16.mxu0 0
        %881 = vmatpush1.bf16.msra.mxu0 0
        %882 = vmatprep.subr.bf16.mxu0 0
        %883 = vmatpush1.bf16.msra.mxu0 0
        %884 = vmatprep.subr.bf16.mxu0 0
        %885 = vmatpush1.bf16.msra.mxu0 0
        %886 = vmatprep.subr.bf16.mxu0 0
        %887 = vmatpush1.bf16.msra.mxu0 0
        %888 = vmatprep.subr.bf16.mxu0 0
        %889 = vmatpush1.bf16.msra.mxu0 0
        %890 = vmatprep.subr.bf16.mxu0 0
        %891 = vmatpush1.bf16.msra.mxu0 0
        %892 = vmatprep.subr.bf16.mxu0 0
        %893 = vmatpush1.bf16.msra.mxu0 0
        %894 = vmatprep.subr.bf16.mxu0 0
        %895 = vmatpush1.bf16.msra.mxu0 0
        %896 = vmatprep.subr.bf16.mxu0 0
        %897 = vmatpush1.bf16.msra.mxu0 0
        %898 = vmatprep.mubr.bf16.mxu0 0
        %899 = vmatmul.mubr.bf16.gmra.mrb[0].mxu0 %v858
        %v900 = vpop.f32.mrb[0].mxu0
        %v901 = vadd.f32 0.0, %v900
        %v902 = vpop.f32.mrb[0].mxu0
        %v903 = vpop.f32.mrb[0].mxu0
        %v904 = vadd.f32 0.0, %v903
        %v905 = vpop.f32.mrb[0].mxu0
        %906 = vmatprep.mubr.bf16.mxu0 0
        %907 = vmatmul.mubr.bf16.gmra.mrb[0].mxu0 %v861
        %v908 = vpop.f32.mrb[0].mxu0
        %v909 = vadd.f32 0.0, %v908
        %v910 = vpop.f32.mrb[0].mxu0
        %v911 = vpop.f32.mrb[0].mxu0
        %v912 = vadd.f32 0.0, %v911
        %v913 = vpop.f32.mrb[0].mxu0
        %914 = vdwg.mxu0
        %v915 = vadd.f32 %v846, %v901
        %v916 = vadd.f32 %v847, %v904
        %v917 = vadd.f32 %v848, %v909
        %v918 = vadd.f32 %v849, %v912
        %s919 = smul.u32 %s217, 32
        %s920 = scalar_lea.vmem %s194, %s919
        %921 = vst [vmem:[%s920] sm:$0xff] %v915
        %922 = vst [vmem:[%s920 + $0x8] sm:$0xff] %v916
        %923 = vst [vmem:[%s920 + $0x10] sm:$0xff] %v917
        %924 = vst [vmem:[%s920 + $0x18] sm:$0x3f] %v918
      $region37: #{tpu_custom_call.1} parent=31 // loop_footer
        %s221 = sadd.s32 1, %s217
      $region38: #{tpu_custom_call.1} parent=31 // loop_footer_branch
        %216 = sbr.rel target = $region34
      $region39: #{tpu_custom_call.1} parent=31 // loop_exit
        _
      %s925 = smul.u32 30, %s19
      %p926 = scmp.lt.s32.totalorder %s18, 1
      %s927 = scalar_select %p926, %s18, 1
      %p928 = scmp.lt.s32.totalorder %s925, 29
      %s929 = scalar_select %p928, %s925, 29
      %s930 = smul.addr %s929, 4
      %s931 = smul.addr %s927, 120
      %s932 = sadd.s32 %s930, %s931
      %s933 = smul.addr %s932, 8
      %s934 = scalar_lea.vmem %s3, %s933
      // Predicated region
      $region40: #{tpu_custom_call.1} parent=31 // pred_check
        %p935 = pneg %p114
      $region41: #{tpu_custom_call.1} parent=31 // pred_check_branch
        %937 = sbr.rel (%p935) target = $region43
      $region42: #{tpu_custom_call.1} parent=31 // pred_region
        %s938 = smul.u32 30, %s19
      $region43: #{tpu_custom_call.1} parent=31 // pred_fallthru
        _
    $region32: #{tpu_custom_call.1} parent=5 // pred_fallthru
      _
    %p939 = scmp.le.s32.totalorder 2, %s9
    // Predicated region
    $region44: #{tpu_custom_call.1} parent=5 // pred_check
      %p940 = pneg %p939
    $region45: #{tpu_custom_call.1} parent=5 // pred_check_branch
      %942 = sbr.rel (%p940) target = $region47
    $region46: #{tpu_custom_call.1} parent=5 // pred_region
      %s943 = ssub.s32 %s9, 2
      // Predicated region
      $region48: #{tpu_custom_call.1} parent=46 // pred_check
        %p944 = pneg %p120
      $region49: #{tpu_custom_call.1} parent=46 // pred_check_branch
        %946 = sbr.rel (%p944) target = $region51
      $region50: #{tpu_custom_call.1} parent=46 // pred_region
        %s947 = smul.u32 30, %s21
        %p948 = scmp.lt.s32.totalorder %s20, 1
        %s949 = scalar_select %p948, %s20, 1
        %p950 = scmp.lt.s32.totalorder %s947, 29
        %s951 = scalar_select %p950, %s947, 29
        %s952 = smul.addr %s951, 4
        %s953 = smul.addr %s949, 120
        %s954 = sadd.s32 %s952, %s953
        %s955 = smul.addr %s954, 8
        %s956 = scalar_lea.vmem %s3, %s955
      $region51: #{tpu_custom_call.1} parent=46 // pred_fallthru
        _
    $region47: #{tpu_custom_call.1} parent=5 // pred_fallthru
      _
  $region6: #{tpu_custom_call.1} parent=0 // loop_footer
    %s13 = sadd.s32 1, %s9
  $region7: #{tpu_custom_call.1} parent=0 // loop_footer_branch
    %8 = sbr.rel target = $region3
  $region8: #{tpu_custom_call.1} parent=0 // loop_exit
    _

</llo_original>
